<compile_context>
chip_gen: v5e
topology: v5e:2x2
jax: 0.10.0
libtpu: 0.0.40
codegen_flags: <defaults>
</compile_context>

<pallas_src>
import jax
import jax.numpy as jnp
from jax.experimental import pallas as pl
from jax.experimental.pallas import tpu as pltpu

_LANES = 128          # vreg lane width
_SUBLANES = 8         # f32 sublane granularity for the (8, 128) tiling rule
_MIN_SPLIT_ROWS = 2048  # only split a single-tile table if both halves stay >= ~1 MiB


def _round_up(x, m):
    return ((x + m - 1) // m) * m


def _cdiv(a, b):
    return -(-a // b)


def _vmem_budget():
    """Generation-aware (tile_bytes, vmem_limit_bytes)."""
    phys = 64 << 20                      # conservative fallback: v7x per-TC VMEM
    try:
        phys = int(pltpu.get_tpu_info().vmem_capacity_bytes)
    except Exception:
        pass
    phys = max(phys, 32 << 20)
    # The copy pipeline holds 2 input + 2 output buffers of one tile each.
    # Use at most half of physical VMEM for those 4 tiles, capped at 32 MiB
    # total (=> 8 MiB tiles, i.e. 16384 rows of a 128-lane f32 slab, on
    # v5e / v6e / v7x alike).
    pipe = min(phys // 2, 32 << 20)
    tile_bytes = pipe // 4
    vmem_limit = min(phys, pipe + (4 << 20))   # pipeline + a little headroom
    return tile_bytes, vmem_limit


_TILE_BYTES, _VMEM_LIMIT = _vmem_budget()


def _identity_copy_kernel(x_ref, o_ref):
    # Exact semantics of RelGraphEmbed.forward(): tables pass through
    # unchanged (activation / dropout are stored but never applied).
    o_ref[...] = x_ref[...]


def _choose_row_block(rows, lanes, itemsize):
    # VMEM pads the lane (last) dim to 128 and the sublane dim to 8, so budget
    # the tile with its padded VMEM footprint, not the logical bytes.
    padded_lanes = _round_up(lanes, _LANES)
    cap = (_TILE_BYTES // (padded_lanes * itemsize)) // _SUBLANES * _SUBLANES
    cap = max(cap, _SUBLANES)
    rows8 = _round_up(rows, _SUBLANES)
    if rows8 <= cap:
        if rows8 >= 2 * _MIN_SPLIT_ROWS:
            # Whole table fits one oversized tile: split in two so v7x's
            # second TensorCore also gets a block to copy.
            return _round_up(_cdiv(rows8, 2), _SUBLANES)
        return rows8
    return cap


@jax.jit
def _materialize_table(table):
    """Identity-materialize one (n, d) table with a single Pallas copy.

    No concatenate / pad / slice: HBM traffic is exactly one read and one
    write of the table.  The grid tiles the row dimension with large
    (multi-MiB) blocks; Pallas masks the final partial block automatically,
    so arbitrary row counts need no explicit padding traffic.
    """
    rows, lanes = table.shape
    row_block = _choose_row_block(rows, lanes, table.dtype.itemsize)
    return pl.pallas_call(
        _identity_copy_kernel,
        out_shape=jax.ShapeDtypeStruct((rows, lanes), table.dtype),
        grid=(_cdiv(rows, row_block),),
        in_specs=[pl.BlockSpec((row_block, lanes), lambda i: (i, 0))],
        out_specs=pl.BlockSpec((row_block, lanes), lambda i: (i, 0)),
        compiler_params=pltpu.CompilerParams(
            # No-op on v5e/v6e (1 TC); lets v7x shard row tiles over its 2 TCs.
            dimension_semantics=("parallel",),
            # Raise the scoped-VMEM limit so 8 MiB tiles also work on v5e
            # (16 MiB scoped default) without shrinking the pipeline.
            vmem_limit_bytes=_VMEM_LIMIT,
        ),
    )(table)


class RelGraphEmbedPallas:
    """JAX/Pallas port of RelGraphEmbed (featureless-heterograph embed layer).

    embeds: dict[ntype] -> (num_nodes[ntype], embed_size) float32 table.
    'customer' uses the provided real feature matrix (g.ndata['x']['customer']);
    other node types get deterministically initialized embedding parameters
    (mirroring the nn.ParameterDict of the PyTorch module).
    """

    def __init__(self, ntypes, num_nodes_per_type, embed_size, customer_feat,
                 activation=None, dropout=0.0, seed=0):
        # activation / dropout are stored but (as in the reference forward)
        # never applied.
        self.activation = activation
        self.dropout = dropout
        self.ntypes = list(ntypes)
        self.embeds = {}
        key = jax.random.PRNGKey(seed)
        for ntype in self.ntypes:
            key, sub = jax.random.split(key)
            if ntype == "customer":
                table = jnp.asarray(customer_feat, dtype=jnp.float32)
            else:
                n = int(num_nodes_per_type[ntype])
                scale = 1.0 / float(embed_size) ** 0.5
                table = jax.random.uniform(
                    sub, (n, embed_size), dtype=jnp.float32,
                    minval=-scale, maxval=scale)
            self.embeds[ntype] = table

    def forward(self, block=None):
        # One minimal-traffic Pallas identity copy per table; forward() then
        # returns the dict exactly like the PyTorch module.
        return {nt: _materialize_table(self.embeds[nt]) for nt in self.ntypes}


if __name__ == "__main__":
    key = jax.random.PRNGKey(0)

    embed_size = 32
    ntypes = ["customer", "product"]
    num_nodes_per_type = {"customer": 64, "product": 32}

    # Real features for 'customer' nodes (g.ndata['x']['customer']).
    key, kfeat = jax.random.split(key)
    customer_feat = jax.random.normal(
        kfeat, (num_nodes_per_type["customer"], embed_size), dtype=jnp.float32)

    model = RelGraphEmbedPallas(
        ntypes, num_nodes_per_type, embed_size, customer_feat, seed=0)

    out = model.forward()
    for nt in ntypes:
        jax.block_until_ready(out[nt])

    # Sanity check against the pure-JAX reference (identity pass-through).
    ok = True
    for nt in ntypes:
        ok = ok and bool(jnp.allclose(out[nt], model.embeds[nt]))
        ok = ok and out[nt].shape == model.embeds[nt].shape
        ok = ok and out[nt].dtype == model.embeds[nt].dtype
    assert ok, "Pallas forward does not match reference"

    print("KERNEL_OK")
</pallas_src>

<mosaic_0001>
module attributes {stable_mosaic.version = 11 : i64} {
  func.func @_identity_copy_kernel(%arg0: i32, %arg1: memref<64x32xf32, #tpu.memory_space<vmem>>, %arg2: memref<64x32xf32, #tpu.memory_space<vmem>>) attributes {dimension_semantics = [#tpu.dimension_semantics<parallel>], iteration_bounds = array<i64: 1>, scalar_prefetch = 0 : i64, scratch_operands = 0 : i64, tpu.core_type = #tpu.core_type<tc>, window_params = [{transform_indices = @transform_0, window_bounds = array<i64: 64, 32>}, {transform_indices = @transform_1, window_bounds = array<i64: 64, 32>}]} {
    %c0 = arith.constant 0 : index
    %c0_0 = arith.constant 0 : index
    %0 = vector.load %arg1[%c0, %c0_0] : memref<64x32xf32, #tpu.memory_space<vmem>>, vector<64x32xf32>
    %c0_1 = arith.constant 0 : index
    %c0_2 = arith.constant 0 : index
    %1 = vector.load %arg2[%c0_1, %c0_2] : memref<64x32xf32, #tpu.memory_space<vmem>>, vector<64x32xf32>
    tpu.vector_store %arg2[%c0_1, %c0_2], %0 {strides = array<i32>} : memref<64x32xf32, #tpu.memory_space<vmem>>, vector<64x32xf32>,
    return
  }
  func.func @transform_0(%arg0: i32) -> (i32, i32) {
    %c0_i32 = arith.constant 0 : i32
    %c0_i32_0 = arith.constant 0 : i32
    return %arg0, %c0_i32 : i32, i32
  }
  func.func @transform_1(%arg0: i32) -> (i32, i32) {
    %c0_i32 = arith.constant 0 : i32
    %c0_i32_0 = arith.constant 0 : i32
    return %arg0, %c0_i32 : i32, i32
  }
}

</mosaic_0001>

<llo_original>
// kernel: _materialize_table.1
$region0: #{_materialize_table.1}
  #allocation0 [shape = 'u32[]', space=smem, size = 0x4, offset = 0x4, fixed_abs, tag = 'smem constant byte address 0x4 - core index']
  #allocation1 [shape = 'u32[72,128]{1,0:T(1,128)}', space=vmem, size = 0x9000, scoped, tag = 'internal scratch']
  %s0 = inlined_call_operand.vmem [shape: f32[64,32], index: 0, kind: input, shape index: {}]
  %s1 = inlined_call_operand.vmem [shape: f32[64,32], index: 1, kind: output, shape index: {}]
  %s2 = sld [smem:[#allocation0]]
  $region14: #{_materialize_table.1} parent=0
    _
  %s4 = ssub.s32 1, %s2
  %s5 = scalar_select 0, %s4, %s2
  // Predicated region
  $region2: #{_materialize_table.1} parent=0 // pred_check
    _
  $region3: #{_materialize_table.1} parent=0 // pred_check_branch
    %7 = sbr.rel (0) target = $region5
  $region4: #{_materialize_table.1} parent=0 // pred_region
    _
  $region5: #{_materialize_table.1} parent=0 // pred_fallthru
    _
  %v8 = vld [vmem:[%s0] sm:$0xff]
  %v9 = vld [vmem:[%s0 + $0x8] sm:$0xff]
  %v10 = vld [vmem:[%s0 + $0x10] sm:$0xff]
  %v11 = vld [vmem:[%s0 + $0x18] sm:$0xff]
  %v12 = vld [vmem:[%s0 + $0x20] sm:$0xff]
  %v13 = vld [vmem:[%s0 + $0x28] sm:$0xff]
  %v14 = vld [vmem:[%s0 + $0x30] sm:$0xff]
  %v15 = vld [vmem:[%s0 + $0x38] sm:$0xff]
  %vm16 = vcmask 261120
  %17 = vst.msk [vmem:[%s1] sm:$0xff] %vm16, %v8
  %18 = vst.msk [vmem:[%s1 + $0x8] sm:$0xff] %vm16, %v9
  %19 = vst.msk [vmem:[%s1 + $0x10] sm:$0xff] %vm16, %v10
  %20 = vst.msk [vmem:[%s1 + $0x18] sm:$0xff] %vm16, %v11
  %21 = vst.msk [vmem:[%s1 + $0x20] sm:$0xff] %vm16, %v12
  %22 = vst.msk [vmem:[%s1 + $0x28] sm:$0xff] %vm16, %v13
  %23 = vst.msk [vmem:[%s1 + $0x30] sm:$0xff] %vm16, %v14
  %24 = vst.msk [vmem:[%s1 + $0x38] sm:$0xff] %vm16, %v15
  // Predicated region
  $region6: #{_materialize_table.1} parent=0 // pred_check
    _
  $region7: #{_materialize_table.1} parent=0 // pred_check_branch
    %26 = sbr.rel (0) target = $region9
  $region8: #{_materialize_table.1} parent=0 // pred_region
    _
  $region9: #{_materialize_table.1} parent=0 // pred_fallthru
    _
  // Predicated region
  $region10: #{_materialize_table.1} parent=0 // pred_check
    _
  $region11: #{_materialize_table.1} parent=0 // pred_check_branch
    %28 = sbr.rel (0) target = $region13
  $region12: #{_materialize_table.1} parent=0 // pred_region
    _
  $region13: #{_materialize_table.1} parent=0 // pred_fallthru
    _

</llo_original>
